<compile_context>
chip_gen: v6e
topology: v6e:2x2x1
jax: 0.10.0
libtpu: 0.0.40
codegen_flags: <defaults>
</compile_context>

<pallas_src>
import jax
import jax.numpy as jnp
from jax import lax
from jax.experimental import pallas as pl
from jax.experimental.pallas import tpu as pltpu

_FALLBACK_BLOCK_BYTES = 3 * 1024 * 1024   # safe under v5e's 16 MiB scoped default
_MIN_BLOCK_BYTES = 1 * 1024 * 1024        # don't shrink blocks below ~1 MiB
_TARGET_GRID_STEPS = 8                    # feed both v7x TCs + keep DMA pipeline busy


def zmuv_kernel(mean_ref, mean2_ref, x_ref, o_ref):
    # mean/mean2 are (1,) f32 scalars in SMEM.  Do the scale/shift derivation
    # here on a (1,1) vector so rsqrt lands in the (idle) EUP slot and no
    # scalar-core float transcendental lowering is required.
    m = jnp.full((1, 1), mean_ref[0], dtype=jnp.float32)
    m2 = jnp.full((1, 1), mean2_ref[0], dtype=jnp.float32)
    # Clamp only guards the degenerate mean2 <= mean^2 case (the PyTorch
    # reference has no epsilon); otherwise the math is unchanged.
    var = jnp.maximum(m2 - m * m, jnp.finfo(jnp.float32).tiny)
    inv_std = lax.rsqrt(var)                # EUP
    shift = -m * inv_std
    xf = x_ref[...].astype(jnp.float32)     # free: kernel is HBM-bound
    # TODO(synk): a bf16-native path on v6e/v7x would save the unpack/repack
    # per vreg, but it is pure VPU-slot filler today.
    o_ref[...] = (xf * inv_std + shift).astype(o_ref.dtype)


def _choose_lanes(n):
    """Prefer a wide lane count that divides n exactly (no pad copy)."""
    for cand in (1024, 512, 256, 128):
        if n % cand == 0:
            return cand, False
    return 128, True  # ragged: minimal-pad fallback


def _block_bytes_and_vmem_limit():
    """Generation-aware block size + scoped-VMEM limit."""
    try:
        info = pltpu.get_tpu_info()
        vmem_cap = int(getattr(info, "vmem_capacity_bytes", 0))
    except Exception:
        vmem_cap = 0
    if vmem_cap <= 0:
        # Unknown chip: conservative blocks, leave the default scoped limit.
        return _FALLBACK_BLOCK_BYTES, None
    # Use up to half of physical VMEM (capped at 48 MiB) as the scoped limit:
    # 48 MiB on v5e/v6e (128 MiB VMEM), 32 MiB on v7x (64 MiB per TC).  Blocks
    # are sized so the 4x double-buffered in+out footprint is ~half the limit.
    vmem_limit = min(vmem_cap // 2, 48 * 1024 * 1024)
    block_bytes = max(2 * 1024 * 1024, vmem_limit // 8)
    return block_bytes, vmem_limit


def zmuv_forward(x, mean, mean2, *, in_place=False):
    """Applies (x - mean) / sqrt(mean2 - mean^2) elementwise via Pallas."""
    orig_shape = x.shape
    orig_dtype = x.dtype
    n = int(x.size)
    if n == 0:
        return x  # degenerate empty tensor: nothing to do

    mean_s = jnp.reshape(jnp.asarray(mean, dtype=jnp.float32), (-1,))[:1]
    mean2_s = jnp.reshape(jnp.asarray(mean2, dtype=jnp.float32), (-1,))[:1]

    flat = jnp.reshape(x, (-1,))
    lanes, needs_pad = _choose_lanes(n)
    if needs_pad:
        # TODO(synk): the ragged (n % 128 != 0) path still pays a pad + slice
        # round trip (one extra full HBM read+write each way); a masked
        # in-kernel tail (manual DMA of the remainder) would remove it.
        padded_n = pl.cdiv(n, lanes) * lanes
        flat = jnp.pad(flat, (0, padded_n - n))
    else:
        padded_n = n
    rows = padded_n // lanes
    x2d = jnp.reshape(flat, (rows, lanes))

    itemsize = int(jnp.dtype(orig_dtype).itemsize)
    sublane = max(8, 32 // max(1, itemsize))
    row_bytes = lanes * itemsize

    block_bytes, vmem_limit = _block_bytes_and_vmem_limit()
    block_rows = max(sublane, ((block_bytes // row_bytes) // sublane) * sublane)

    # Guarantee >= 2 (targeting ~_TARGET_GRID_STEPS) grid steps for tensors
    # large enough to split, but never shrink blocks below ~1 MiB.
    min_block_rows = max(sublane, ((_MIN_BLOCK_BYTES // row_bytes) // sublane) * sublane)
    if rows > min_block_rows:
        rows_per_step = pl.cdiv(rows, _TARGET_GRID_STEPS)
        rows_per_step = pl.cdiv(rows_per_step, sublane) * sublane
        block_rows = min(block_rows, max(min_block_rows, rows_per_step))
    if block_rows >= rows:
        block_rows = rows  # full-extent block is always legal

    grid = (pl.cdiv(rows, block_rows),)

    cp_kwargs = dict(dimension_semantics=("parallel",))
    if vmem_limit is not None:
        cp_kwargs["vmem_limit_bytes"] = int(vmem_limit)
    # TODO(synk): on v7x, sweeping pipeline_mode=pl.Buffered(3) on the x/out
    # BlockSpecs may recover a few percent once per-step times drop to ~1-2 us.

    out2d = pl.pallas_call(
        zmuv_kernel,
        out_shape=jax.ShapeDtypeStruct((rows, lanes), orig_dtype),
        grid=grid,
        in_specs=[
            pl.BlockSpec(memory_space=pltpu.SMEM),                # mean  (1,)
            pl.BlockSpec(memory_space=pltpu.SMEM),                # mean2 (1,)
            pl.BlockSpec((block_rows, lanes), lambda i: (i, 0)),  # x tile
        ],
        out_specs=pl.BlockSpec((block_rows, lanes), lambda i: (i, 0)),
        input_output_aliases=({2: 0} if in_place else {}),
        compiler_params=pltpu.CompilerParams(**cp_kwargs),
    )(mean_s, mean2_s, x2d)

    if needs_pad:
        return jnp.reshape(jnp.reshape(out2d, (-1,))[:n], orig_shape)
    return jnp.reshape(out2d, orig_shape)


if __name__ == "__main__":
    key = jax.random.PRNGKey(0)
    k1, k2, k3 = jax.random.split(key, 3)

    # Deterministic "running statistics" buffers (as if accumulated via
    # update()), chosen so mean2 - mean^2 > 0 (valid std).
    mean = jnp.array([0.25], dtype=jnp.float32)
    mean2 = jnp.array([1.5], dtype=jnp.float32)
    std = jnp.sqrt(mean2[0] - mean[0] ** 2)

    def ref(x):
        return ((x.astype(jnp.float32) - mean[0]) / std).astype(x.dtype)

    # 1) Small NCHW tensor consistent with the module (single-block path).
    x1 = jax.random.normal(k1, (2, 4, 16, 16), dtype=jnp.float32)
    y1 = jax.block_until_ready(zmuv_forward(x1, mean, mean2))
    assert y1.shape == x1.shape and y1.dtype == x1.dtype
    assert jnp.allclose(y1, ref(x1), atol=1e-5, rtol=1e-5)

    # 2) Larger activation exercising a multi-step grid (megacore sharding).
    x2 = jax.random.normal(k2, (8, 4, 128, 128), dtype=jnp.float32)
    y2 = jax.block_until_ready(zmuv_forward(x2, mean, mean2))
    assert jnp.allclose(y2, ref(x2), atol=1e-5, rtol=1e-5)

    # 2b) Donated, in-place (aliased) path.
    x2b = jnp.reshape(x2, (512, 1024))
    f_inplace = jax.jit(lambda xx: zmuv_forward(xx, mean, mean2, in_place=True),
                        donate_argnums=0)
    y2b = jax.block_until_ready(f_inplace(jnp.array(x2b)))
    assert jnp.allclose(y2b, ref(x2b), atol=1e-5, rtol=1e-5)

    # 3) bf16 input (dtype-aware sublane multiple / cast path).
    x3 = jax.random.normal(k3, (4, 8, 64, 64), dtype=jnp.bfloat16)
    y3 = jax.block_until_ready(zmuv_forward(x3, mean, mean2))
    assert y3.dtype == jnp.bfloat16
    assert jnp.allclose(y3.astype(jnp.float32), ref(x3).astype(jnp.float32),
                        atol=5e-2, rtol=5e-2)

    # 4) Ragged element count (fallback pad path).
    x4 = jax.random.normal(k1, (3, 5, 7), dtype=jnp.float32)
    y4 = jax.block_until_ready(zmuv_forward(x4, mean, mean2))
    assert jnp.allclose(y4, ref(x4), atol=1e-5, rtol=1e-5)

    print("KERNEL_OK")
</pallas_src>

<mosaic_0001>
module attributes {stable_mosaic.version = 11 : i64} {
  func.func @zmuv_kernel(%arg0: i32, %arg1: memref<1xf32, #tpu.memory_space<smem>>, %arg2: memref<1xf32, #tpu.memory_space<smem>>, %arg3: memref<2x1024xf32, #tpu.memory_space<vmem>>, %arg4: memref<2x1024xf32, #tpu.memory_space<vmem>>) attributes {dimension_semantics = [#tpu.dimension_semantics<parallel>], iteration_bounds = array<i64: 1>, scalar_prefetch = 0 : i64, scratch_operands = 0 : i64, tpu.core_type = #tpu.core_type<tc>, window_params = [{transform_indices = @transform_0, window_bounds = array<i64: 1>}, {transform_indices = @transform_1, window_bounds = array<i64: 1>}, {transform_indices = @transform_2, window_bounds = array<i64: 2, 1024>}, {transform_indices = @transform_3, window_bounds = array<i64: 2, 1024>}]} {
    %c0 = arith.constant 0 : index
    %0 = memref.load %arg1[%c0] : memref<1xf32, #tpu.memory_space<smem>>
    %1 = vector.broadcast %0 : f32 to vector<1x1xf32>
    %c0_0 = arith.constant 0 : index
    %2 = memref.load %arg2[%c0_0] : memref<1xf32, #tpu.memory_space<smem>>
    %3 = vector.broadcast %2 : f32 to vector<1x1xf32>
    %4 = arith.mulf %1, %1 : vector<1x1xf32>
    %5 = arith.subf %3, %4 : vector<1x1xf32>
    %cst = arith.constant 1.17549435E-38 : f32
    %6 = vector.broadcast %cst : f32 to vector<1x1xf32>
    %7 = arith.maximumf %5, %6 : vector<1x1xf32>
    %8 = math.rsqrt %7 : vector<1x1xf32>
    %cst_1 = arith.constant 0.000000e+00 : f32
    %9 = vector.broadcast %cst_1 : f32 to vector<1x1xf32>
    %10 = arith.subf %9, %1 : vector<1x1xf32>
    %11 = arith.mulf %10, %8 : vector<1x1xf32>
    %c0_2 = arith.constant 0 : index
    %c0_3 = arith.constant 0 : index
    %12 = vector.load %arg3[%c0_2, %c0_3] : memref<2x1024xf32, #tpu.memory_space<vmem>>, vector<2x1024xf32>
    %13 = vector.broadcast %8 : vector<1x1xf32> to vector<2x1024xf32>
    %14 = arith.mulf %12, %13 : vector<2x1024xf32>
    %15 = vector.broadcast %11 : vector<1x1xf32> to vector<2x1024xf32>
    %16 = arith.addf %14, %15 : vector<2x1024xf32>
    %c0_4 = arith.constant 0 : index
    %c0_5 = arith.constant 0 : index
    %17 = vector.load %arg4[%c0_4, %c0_5] : memref<2x1024xf32, #tpu.memory_space<vmem>>, vector<2x1024xf32>
    tpu.vector_store %arg4[%c0_4, %c0_5], %16 {strides = array<i32>} : memref<2x1024xf32, #tpu.memory_space<vmem>>, vector<2x1024xf32>,
    return
  }
  func.func @transform_0(%arg0: i32) -> i32 {
    %c0_i32 = arith.constant 0 : i32
    %c0_i32_0 = arith.constant 0 : i32
    return %c0_i32 : i32
  }
  func.func @transform_1(%arg0: i32) -> i32 {
    %c0_i32 = arith.constant 0 : i32
    %c0_i32_0 = arith.constant 0 : i32
    return %c0_i32 : i32
  }
  func.func @transform_2(%arg0: i32) -> (i32, i32) {
    %c0_i32 = arith.constant 0 : i32
    %c0_i32_0 = arith.constant 0 : i32
    return %arg0, %c0_i32 : i32, i32
  }
  func.func @transform_3(%arg0: i32) -> (i32, i32) {
    %c0_i32 = arith.constant 0 : i32
    %c0_i32_0 = arith.constant 0 : i32
    return %arg0, %c0_i32 : i32, i32
  }
}

</mosaic_0001>

<llo_original>
// kernel: tpu_custom_call.1
$region0: #{tpu_custom_call.1}
  #allocation0 [shape = 'u32[]', space=smem, size = 0x4, offset = 0x4, fixed_abs, tag = 'smem constant byte address 0x4 - core index']
  #allocation1 [shape = 'u32[144,128]{1,0:T(1,128)}', space=vmem, size = 0x12000, scoped, tag = 'internal scratch']
  #allocation2 [shape = 'f32[1]{0:T(128)S(6)}', space=smem, size = 0x200, scoped, tag = 'scoped memory for tpu_custom_call.1']
  #allocation3 [shape = 'f32[1]{0:T(128)S(6)}', space=smem, size = 0x200, scoped, tag = 'scoped memory for tpu_custom_call.1']
  %s0 = inlined_call_operand.<no memory space> [shape: f32[1], index: 0, kind: input, shape index: {}]
  %s1 = inlined_call_operand.<no memory space> [shape: f32[1], index: 1, kind: input, shape index: {}]
  %s2 = inlined_call_operand.hbm [shape: f32[2,1024], index: 2, kind: input, shape index: {}]
  %s3 = inlined_call_operand.hbm [shape: f32[2,1024], index: 3, kind: output, shape index: {}]
  %s4 = sld [smem:[#allocation0]]
  $region26: #{tpu_custom_call.1} parent=0
    _
  %s6 = ssub.s32 1, %s4
  %s7 = scalar_select 0, %s6, %s4
  %8 = sst [smem:[#allocation2]] %s0
  %9 = sst [smem:[#allocation3]] %s1
  $region1: #{tpu_custom_call.1} parent=0
    #allocation4 [shape = 'u8[8192]{0}', space=vmem, size = 0x2000, scoped, tag = 'input window, operand 2, single buffered']
    #allocation5 [shape = 's32[1]{0}', space=sflag, size = 0x4, scoped, tag = 'scoped memory for tpu_custom_call.1']
    #allocation6 [shape = 's32[1]{0}', space=sflag, size = 0x4, scoped, tag = 'scoped memory for tpu_custom_call.1']
    #allocation7 [shape = 'u8[8192]{0}', space=vmem, size = 0x2000, scoped, tag = 'output window, operand 0, single buffered']
    %10 = vsyncpa [#allocation5], 0
    %11 = vsyncpa [#allocation6], 0
    // Predicated region
    $region2: #{tpu_custom_call.1} parent=1 // pred_check
      _
    $region3: #{tpu_custom_call.1} parent=1 // pred_check_branch
      %13 = sbr.rel (0) target = $region5
    $region4: #{tpu_custom_call.1} parent=1 // pred_region
      _
    $region5: #{tpu_custom_call.1} parent=1 // pred_fallthru
      _
    // Predicated region
    $region6: #{tpu_custom_call.1} parent=1 // pred_check
      _
    $region7: #{tpu_custom_call.1} parent=1 // pred_check_branch
      %15 = sbr.rel (0) target = $region9
    $region8: #{tpu_custom_call.1} parent=1 // pred_region
      _
    $region9: #{tpu_custom_call.1} parent=1 // pred_fallthru
      _
    // Predicated region
    $region10: #{tpu_custom_call.1} parent=1 // pred_check
      _
    $region11: #{tpu_custom_call.1} parent=1 // pred_check_branch
      %17 = sbr.rel (0) target = $region13
    $region12: #{tpu_custom_call.1} parent=1 // pred_region
      %s19 = ssub.s32 256, 256
      %20 = vsyncadd [#allocation5], %s19
      %s22 = sshll.u32 [#allocation4], 4
      %s23 = int_to_ptr.vmem [resolvable:$true] %s22
      %25 = dma.hbm_to_vmem [thread:$0]  %s2, 256, %s23, [#allocation5]
    $region13: #{tpu_custom_call.1} parent=1 // pred_fallthru
      _
    // Predicated region
    $region14: #{tpu_custom_call.1} parent=1 // pred_check
      _
    $region15: #{tpu_custom_call.1} parent=1 // pred_check_branch
      %27 = sbr.rel (0) target = $region17
    $region16: #{tpu_custom_call.1} parent=1 // pred_region
      %28 = dma.done [#allocation5], 256
    $region17: #{tpu_custom_call.1} parent=1 // pred_fallthru
      _
    %s29 = sld [smem:[#allocation2]]
    %v30 = vstv %s29
    %s31 = sld [smem:[#allocation3]]
    %v32 = vstv %s31
    %v33 = vmul.f32 %v30, %v30
    %v34 = vsub.f32 %v32, %v33
    %v35 = vmax.f32 %v34, 1.1754944e-38
    %v36 = vrsqrt.pop %v35
    %v37 = vsub.f32 0.0, %v30
    %v38 = vmul.f32 %v37, %v36
    %v39 = vld [vmem:[#allocation4] sm:$0xff]
    %v40 = vld [vmem:[#allocation4 + $0x8] sm:$0xff]
    %v41 = vmul.f32 %v39, %v36
    %v42 = vmul.f32 %v40, %v36
    %v43 = vadd.f32 %v41, %v38
    %v44 = vadd.f32 %v42, %v38
    %45 = vst [vmem:[#allocation7] sm:$0xff] %v43
    %46 = vst [vmem:[#allocation7 + $0x8] sm:$0xff] %v44
    // Predicated region
    $region18: #{tpu_custom_call.1} parent=1 // pred_check
      _
    $region19: #{tpu_custom_call.1} parent=1 // pred_check_branch
      %48 = sbr.rel (0) target = $region21
    $region20: #{tpu_custom_call.1} parent=1 // pred_region
      %s50 = ssub.s32 256, 256
      %51 = vsyncadd [#allocation6], %s50
      %s53 = sshll.u32 [#allocation7], 4
      %s54 = int_to_ptr.vmem [resolvable:$true] %s53
      %56 = dma.vmem_to_hbm [thread:$0]  %s54, 256, %s3, [#allocation6]
    $region21: #{tpu_custom_call.1} parent=1 // pred_fallthru
      _
    // Predicated region
    $region22: #{tpu_custom_call.1} parent=1 // pred_check
      _
    $region23: #{tpu_custom_call.1} parent=1 // pred_check_branch
      %58 = sbr.rel (0) target = $region25
    $region24: #{tpu_custom_call.1} parent=1 // pred_region
      %59 = dma.done [#allocation6], 256
    $region25: #{tpu_custom_call.1} parent=1 // pred_fallthru
      _
    %60 = vsyncpa [#allocation5], 1
    %61 = vsyncpa [#allocation6], 1

</llo_original>
